<compile_context>
chip_gen: v5e
topology: v5e:2x2
jax: 0.10.0
libtpu: 0.0.40
codegen_flags: <defaults>
</compile_context>

<pallas_src>
import functools
import math

import jax
import jax.numpy as jnp
from jax.experimental import pallas as pl
from jax.experimental.pallas import tpu as pltpu


def _round_up(x, m):
    return (x + m - 1) // m * m


def _cdiv(a, b):
    return (a + b - 1) // b


# ---------------------------------------------------------------------------
# Kernel body
# ---------------------------------------------------------------------------
def _decoder_kernel(n_layers, tile_head_ref, x_ref, *refs):
    """refs = (w0, b0, w1, b1, ..., w_{L-1}, b_{L-1}, o_ref)."""
    del tile_head_ref                       # consumed only by the index_maps
    o_ref = refs[-1]
    params = refs[:-1]

    act = x_ref[...]                        # (TB, in_p)
    for l in range(n_layers):
        w_ref = params[2 * l]               # (in_l_p, out_l_p)  head dim squeezed
        b_ref = params[2 * l + 1]           # (1, out_l_p) f32
        y = jnp.dot(act.astype(w_ref.dtype), w_ref[...],
                    preferred_element_type=jnp.float32) + b_ref[...]
        if l < n_layers - 1:
            y = jnp.maximum(y, 0.0)         # ReLU in f32 on the VPU
            # TODO(synk): nn.Dropout(p_drop) omitted; module default p_drop=0.0
            #             makes it the identity.
        act = y
    o_ref[...] = act.astype(o_ref.dtype)    # lane-dense, written exactly once


# ---------------------------------------------------------------------------
# Hardware-aware policy
# ---------------------------------------------------------------------------
def _tpu_policy():
    """Returns (vmem_limit_bytes, tile-picker budget bytes, MXU M alignment)."""
    vmem_cap = 128 * 1024 * 1024
    try:
        vmem_cap = int(pltpu.get_tpu_info().vmem_capacity_bytes)
    except Exception:
        pass
    # Scoped limit ~3/4 of physical, capped at 100 MiB:
    #   v7x (64 MiB)  -> 48 MiB scoped;  v5e/v6e (128 MiB) -> 96 MiB scoped.
    vmem_limit = min(vmem_cap * 3 // 4, 100 * 1024 * 1024)
    budget = vmem_limit * 85 // 100         # picker headroom inside the limit
    mxu_m = 256                             # v6e / v7x MXU M
    try:
        kind = jax.devices()[0].device_kind.lower()
        if "v5" in kind or "v4" in kind or "v3" in kind:
            mxu_m = 128                     # 128-wide MXU generations
    except Exception:
        pass
    return vmem_limit, budget, mxu_m


def _pick_batch_tile(B, n_heads, dims_p, budget_bytes, weight_bufs, mxu_m,
                     act_bytes):
    """Pick the batch tile TB.

    Returns None if the per-layer weights alone do not fit the VMEM budget (the
    caller then uses the dense fallback).
    TODO(synk): very wide layers would additionally need an output-feature grid
    axis so no single weight block exceeds a few MiB; not needed for this
    module's typical (microbiome-scale) feature sizes.
    """
    w_bytes = sum(dims_p[i] * dims_p[i + 1] * act_bytes
                  for i in range(len(dims_p) - 1))
    b_bytes = sum(d * 4 for d in dims_p[1:])
    fixed = weight_bufs * w_bytes + 2 * b_bytes
    avail = budget_bytes - fixed
    if avail <= 0:
        return None

    # Per-row VMEM: double-buffered x block + out block, plus in-flight f32 acts.
    per_row = 2 * (dims_p[0] * act_bytes + dims_p[-1] * 4) + 2 * max(dims_p) * 4
    vmem_tb = max(16, (avail // per_row) // 16 * 16)

    # Cap by the per-head group size so padded dead rows stay bounded.
    per_head = _cdiv(B, n_heads)
    cap = _round_up(max(per_head, 16), 16)

    tb = min(vmem_tb, cap, 1024)
    if tb >= mxu_m:
        tb = tb // mxu_m * mxu_m            # align down to the MXU M dimension
    elif per_head >= mxu_m // 2 and mxu_m <= min(vmem_tb, 1024):
        tb = mxu_m                          # groups big enough -> fill the MXU
    tb = max(16, tb)

    # Prefer >= 2 grid steps so the "parallel" axis can split across v7x's TCs.
    if n_heads == 1 and B > 16 and tb >= B:
        tb = max(16, _round_up(_cdiv(B, 2), 16))
    return tb


# ---------------------------------------------------------------------------
# Pure-JAX dense path (reference + small-problem / oversized-weight fallback)
# ---------------------------------------------------------------------------
def _dense_forward(x, head_idx, weights, biases, use_bf16=False):
    mxu_dtype = jnp.bfloat16 if use_bf16 else jnp.float32
    act = x.astype(jnp.float32)
    n_layers = len(weights)
    for l in range(n_layers):
        w = weights[l].astype(mxu_dtype)[head_idx]             # (B, in_l, out_l)
        b = biases[l][head_idx].astype(jnp.float32)            # (B, out_l)
        act = jnp.einsum('bi,bio->bo', act.astype(mxu_dtype), w,
                         preferred_element_type=jnp.float32) + b
        if l < n_layers - 1:
            act = jnp.maximum(act, 0.0)
    return act


# ---------------------------------------------------------------------------
# Pallas forward pass
# ---------------------------------------------------------------------------
def multihead_decoder_forward(x, head_idx, weights, biases, *,
                              use_bf16=True, out_dtype=jnp.float32,
                              force_pallas=False, single_buffer_weights=True,
                              small_problem_flops=8 * 1024 * 1024):
    """x: (B, in_features) f32, head_idx: (B,) int32 in [0, n_heads),
    weights: list of (n_heads, in_i, out_i), biases: list of (n_heads, out_i).
    Returns (B, out_features) in out_dtype."""
    n_layers = len(weights)
    n_heads = int(weights[0].shape[0])
    B, in_features = x.shape
    out_features = int(weights[-1].shape[-1])

    mxu_dtype = jnp.bfloat16 if use_bf16 else jnp.float32
    act_bytes = 2 if use_bf16 else 4

    # ---- lane-dense padded feature dims ----
    dims = [in_features] + [int(w.shape[-1]) for w in weights]
    dims_p = [_round_up(d, 128) for d in dims]

    vmem_limit, budget, mxu_m = _tpu_policy()
    TB = _pick_batch_tile(B, n_heads, dims_p, budget,
                          1 if single_buffer_weights else 2, mxu_m, act_bytes)

    padded_flops = 2 * B * sum(dims_p[i] * dims_p[i + 1] for i in range(n_layers))
    if TB is None or (not force_pallas and padded_flops < small_problem_flops):
        # Tiny problems: 128-lane padding, per-step grid overhead and the
        # sort/scatter traffic dominate; XLA's fused gather-einsum is faster.
        # TB is None when the per-head weights alone exceed the VMEM budget
        # (would need output-feature tiling).
        return _dense_forward(x, head_idx, weights, biases,
                              use_bf16=use_bf16).astype(out_dtype)

    # ---- pad parameters.  Biases reshaped to (n_heads, 1, out_p) so the block's
    #      trailing dims are (1, out_p): full-dim / lane-multiple (Mosaic-safe). ----
    w_p, b_p = [], []
    for l, (w, b) in enumerate(zip(weights, biases)):
        w_p.append(jnp.pad(w, ((0, 0),
                               (0, dims_p[l] - dims[l]),
                               (0, dims_p[l + 1] - dims[l + 1]))).astype(mxu_dtype))
        b_p.append(jnp.pad(b, ((0, 0),
                               (0, dims_p[l + 1] - dims[l + 1])))
                   .astype(jnp.float32).reshape(n_heads, 1, dims_p[l + 1]))

    # ---- group rows by head; pad each head's group to a multiple of TB ----
    head_idx = head_idx.astype(jnp.int32)
    order = jnp.argsort(head_idx)                         # rows sorted by head
    sorted_heads = head_idx[order]
    counts = jnp.bincount(head_idx, length=n_heads)       # rows per head
    padded_counts = ((counts + TB - 1) // TB) * TB
    group_start = jnp.cumsum(padded_counts) - padded_counts
    count_start = jnp.cumsum(counts) - counts
    ranks = jnp.arange(B, dtype=jnp.int32) - count_start[sorted_heads]
    dest_sorted = (group_start[sorted_heads] + ranks).astype(jnp.int32)

    B_pad = _round_up(B + n_heads * (TB - 1), TB)         # static upper bound
    num_tiles = B_pad // TB

    # Fuse sort + column-pad + cast into a single bf16 materialization of x.
    x_sorted = jnp.pad(x[order], ((0, 0), (0, dims_p[0] - dims[0]))).astype(mxu_dtype)
    x_grouped = jnp.zeros((B_pad, dims_p[0]), mxu_dtype).at[dest_sorted].set(x_sorted)

    # Per-tile owning head (scalar-prefetched into SMEM, drives the index_maps).
    tile_head = jnp.searchsorted(jnp.cumsum(padded_counts),
                                 jnp.arange(num_tiles, dtype=jnp.int32) * TB,
                                 side='right')
    tile_head = jnp.minimum(tile_head, n_heads - 1).astype(jnp.int32)

    out_spec = pl.BlockSpec((TB, dims_p[-1]), lambda t, th: (t, 0))
    kernel = functools.partial(_decoder_kernel, n_layers)
    flat_params = [p for wb in zip(w_p, b_p) for p in wb]

    cost = pl.CostEstimate(
        flops=2 * B_pad * sum(dims_p[i] * dims_p[i + 1] for i in range(n_layers)),
        transcendentals=0,
        bytes_accessed=(B_pad * dims_p[0] * act_bytes
                        + B_pad * dims_p[-1] * jnp.dtype(out_dtype).itemsize
                        + sum(int(p.size) * p.dtype.itemsize for p in flat_params)))

    def _call(weight_pipeline_mode):
        in_specs = [pl.BlockSpec((TB, dims_p[0]), lambda t, th: (t, 0))]
        for l in range(n_layers):
            in_specs.append(pl.BlockSpec((None, dims_p[l], dims_p[l + 1]),
                                         lambda t, th: (th[t], 0, 0),
                                         pipeline_mode=weight_pipeline_mode))
            in_specs.append(pl.BlockSpec((None, 1, dims_p[l + 1]),
                                         lambda t, th: (th[t], 0, 0)))
        return pl.pallas_call(
            kernel,
            out_shape=jax.ShapeDtypeStruct((B_pad, dims_p[-1]), out_dtype),
            grid_spec=pltpu.PrefetchScalarGridSpec(
                num_scalar_prefetch=1,
                grid=(num_tiles,),
                in_specs=in_specs,
                out_specs=out_spec,
            ),
            compiler_params=pltpu.CompilerParams(
                dimension_semantics=("parallel",),
                vmem_limit_bytes=vmem_limit,
            ),
            cost_estimate=cost,
        )(tile_head, x_grouped, *flat_params)

    if single_buffer_weights:
        try:
            out_pad = _call(pl.Buffered(1))   # single-buffer the (TB-independent) weights
        except Exception:
            out_pad = _call(None)             # Mosaic without Buffered(1) support
    else:
        out_pad = _call(None)

    # ---- un-group: slice padded columns away BEFORE the row gather ----
    dest_orig = jnp.zeros((B,), jnp.int32).at[order].set(dest_sorted)
    out_trim = out_pad[:, :out_features]
    return out_trim[dest_orig]


# ---------------------------------------------------------------------------
# Parameter init matching the module's shapes (kaiming_uniform-style bounds)
# ---------------------------------------------------------------------------
def _init_params(key, in_features, out_features, n_heads, hidden_features_list):
    dims = [in_features] + list(hidden_features_list) + [out_features]
    weights, biases = [], []
    for i in range(len(dims) - 1):
        fan_in = dims[i]
        key, kw, kb = jax.random.split(key, 3)
        bound = 1.0 / math.sqrt(fan_in)     # kaiming_uniform_(a=sqrt(5)) bound
        weights.append(jax.random.uniform(kw, (n_heads, dims[i], dims[i + 1]),
                                          jnp.float32, -bound, bound))
        biases.append(jax.random.uniform(kb, (n_heads, dims[i + 1]),
                                         jnp.float32, -bound, bound))
    return weights, biases


if __name__ == "__main__":
    key = jax.random.PRNGKey(0)

    # Case 1: tiny shapes typical of the module (latent -> hidden -> features).
    B1, in1, hid1, out1, heads1 = 8, 32, [64], 16, 3
    key, kx, kh, kp = jax.random.split(key, 4)
    x1 = jax.random.normal(kx, (B1, in1), jnp.float32)
    h1 = jax.random.randint(kh, (B1,), 0, heads1, jnp.int32)
    w1, b1 = _init_params(kp, in1, out1, heads1, hid1)
    y1 = jax.block_until_ready(
        multihead_decoder_forward(x1, h1, w1, b1, force_pallas=True))
    r1 = _dense_forward(x1, h1, w1, b1, use_bf16=True)
    assert y1.shape == (B1, out1)
    assert jnp.allclose(y1, r1, atol=2e-3, rtol=2e-3), "case 1 mismatch vs reference"

    # Case 2: larger batch exercising MXU-aligned tiles and multi-tile head groups.
    B2, in2, hid2, out2, heads2 = 512, 128, [256], 64, 4
    key, kx, kh, kp = jax.random.split(key, 4)
    x2 = jax.random.normal(kx, (B2, in2), jnp.float32)
    h2 = jax.random.randint(kh, (B2,), 0, heads2, jnp.int32)
    w2, b2 = _init_params(kp, in2, out2, heads2, hid2)
    y2 = jax.block_until_ready(
        multihead_decoder_forward(x2, h2, w2, b2, force_pallas=True))
    r2 = _dense_forward(x2, h2, w2, b2, use_bf16=True)
    assert y2.shape == (B2, out2)
    assert jnp.allclose(y2, r2, atol=5e-3, rtol=5e-3), "case 2 mismatch vs reference"

    print("KERNEL_OK")
</pallas_src>

<mosaic_0001>
module attributes {stable_mosaic.version = 11 : i64} {
  func.func @_decoder_kernel(%arg0: i32, %arg1: memref<4xi32, #tpu.memory_space<smem>>, %arg2: memref<16x128xbf16, #tpu.memory_space<vmem>>, %arg3: memref<1x128x128xbf16, #tpu.memory_space<vmem>>, %arg4: memref<1x1x128xf32, #tpu.memory_space<vmem>>, %arg5: memref<1x128x128xbf16, #tpu.memory_space<vmem>>, %arg6: memref<1x1x128xf32, #tpu.memory_space<vmem>>, %arg7: memref<16x128xf32, #tpu.memory_space<vmem>>) attributes {dimension_semantics = [#tpu.dimension_semantics<parallel>], iteration_bounds = array<i64: 4>, scalar_prefetch = 1 : i64, scratch_operands = 0 : i64, tpu.core_type = #tpu.core_type<tc>, window_params = [{transform_indices = @transform_0, window_bounds = array<i64: 16, 128>}, {pipeline_mode = #tpu.pipeline_mode<synchronous>, transform_indices = @transform_1, window_bounds = array<i64: 1, 128, 128>}, {transform_indices = @transform_2, window_bounds = array<i64: 1, 1, 128>}, {pipeline_mode = #tpu.pipeline_mode<synchronous>, transform_indices = @transform_3, window_bounds = array<i64: 1, 128, 128>}, {transform_indices = @transform_4, window_bounds = array<i64: 1, 1, 128>}, {transform_indices = @transform_5, window_bounds = array<i64: 16, 128>}]} {
    %c0 = arith.constant 0 : index
    %c0_0 = arith.constant 0 : index
    %0 = vector.load %arg2[%c0, %c0_0] : memref<16x128xbf16, #tpu.memory_space<vmem>>, vector<16x128xbf16>
    %c0_1 = arith.constant 0 : index
    %c0_2 = arith.constant 0 : index
    %c0_3 = arith.constant 0 : index
    %1 = vector.load %arg3[%c0_1, %c0_2, %c0_3] : memref<1x128x128xbf16, #tpu.memory_space<vmem>>, vector<1x128x128xbf16>
    %2 = vector.shape_cast %1 : vector<1x128x128xbf16> to vector<128x128xbf16>
    %cst = arith.constant dense<0.000000e+00> : vector<16x128xf32>
    %3 = tpu.matmul %0, %2, %cst {dimension_numbers = #tpu.dot_dimension_numbers<[1], [0], [0], [1], [0, 0, 1, 1], [], []>} : vector<16x128xbf16>, vector<128x128xbf16>, vector<16x128xf32> -> vector<16x128xf32>
    %c0_4 = arith.constant 0 : index
    %c0_5 = arith.constant 0 : index
    %c0_6 = arith.constant 0 : index
    %4 = vector.load %arg4[%c0_4, %c0_5, %c0_6] : memref<1x1x128xf32, #tpu.memory_space<vmem>>, vector<1x1x128xf32>
    %5 = vector.shape_cast %4 : vector<1x1x128xf32> to vector<1x128xf32>
    %6 = vector.broadcast %5 : vector<1x128xf32> to vector<16x128xf32>
    %7 = arith.addf %3, %6 : vector<16x128xf32>
    %cst_7 = arith.constant 0.000000e+00 : f32
    %8 = vector.broadcast %cst_7 : f32 to vector<16x128xf32>
    %9 = arith.maximumf %7, %8 : vector<16x128xf32>
    %10 = arith.truncf %9 : vector<16x128xf32> to vector<16x128xbf16>
    %c0_8 = arith.constant 0 : index
    %c0_9 = arith.constant 0 : index
    %c0_10 = arith.constant 0 : index
    %11 = vector.load %arg5[%c0_8, %c0_9, %c0_10] : memref<1x128x128xbf16, #tpu.memory_space<vmem>>, vector<1x128x128xbf16>
    %12 = vector.shape_cast %11 : vector<1x128x128xbf16> to vector<128x128xbf16>
    %cst_11 = arith.constant dense<0.000000e+00> : vector<16x128xf32>
    %13 = tpu.matmul %10, %12, %cst_11 {dimension_numbers = #tpu.dot_dimension_numbers<[1], [0], [0], [1], [0, 0, 1, 1], [], []>} : vector<16x128xbf16>, vector<128x128xbf16>, vector<16x128xf32> -> vector<16x128xf32>
    %c0_12 = arith.constant 0 : index
    %c0_13 = arith.constant 0 : index
    %c0_14 = arith.constant 0 : index
    %14 = vector.load %arg6[%c0_12, %c0_13, %c0_14] : memref<1x1x128xf32, #tpu.memory_space<vmem>>, vector<1x1x128xf32>
    %15 = vector.shape_cast %14 : vector<1x1x128xf32> to vector<1x128xf32>
    %16 = vector.broadcast %15 : vector<1x128xf32> to vector<16x128xf32>
    %17 = arith.addf %13, %16 : vector<16x128xf32>
    %c0_15 = arith.constant 0 : index
    %c0_16 = arith.constant 0 : index
    %18 = vector.load %arg7[%c0_15, %c0_16] : memref<16x128xf32, #tpu.memory_space<vmem>>, vector<16x128xf32>
    tpu.vector_store %arg7[%c0_15, %c0_16], %17 {strides = array<i32>} : memref<16x128xf32, #tpu.memory_space<vmem>>, vector<16x128xf32>,
    return
  }
  func.func @transform_0(%arg0: i32, %arg1: memref<4xi32, #tpu.memory_space<smem>>) -> (i32, i32) {
    %c0_i32 = arith.constant 0 : i32
    %c0_i32_0 = arith.constant 0 : i32
    return %arg0, %c0_i32 : i32, i32
  }
  func.func @transform_1(%arg0: i32, %arg1: memref<4xi32, #tpu.memory_space<smem>>) -> (i32, i32, i32) {
    %0 = arith.index_cast %arg0 : i32 to index
    %1 = memref.load %arg1[%0] : memref<4xi32, #tpu.memory_space<smem>>
    %c0_i32 = arith.constant 0 : i32
    %c0_i32_0 = arith.constant 0 : i32
    %c0_i32_1 = arith.constant 0 : i32
    return %1, %c0_i32, %c0_i32_0 : i32, i32, i32
  }
  func.func @transform_2(%arg0: i32, %arg1: memref<4xi32, #tpu.memory_space<smem>>) -> (i32, i32, i32) {
    %0 = arith.index_cast %arg0 : i32 to index
    %1 = memref.load %arg1[%0] : memref<4xi32, #tpu.memory_space<smem>>
    %c0_i32 = arith.constant 0 : i32
    %c0_i32_0 = arith.constant 0 : i32
    %c0_i32_1 = arith.constant 0 : i32
    return %1, %c0_i32, %c0_i32_0 : i32, i32, i32
  }
  func.func @transform_3(%arg0: i32, %arg1: memref<4xi32, #tpu.memory_space<smem>>) -> (i32, i32, i32) {
    %0 = arith.index_cast %arg0 : i32 to index
    %1 = memref.load %arg1[%0] : memref<4xi32, #tpu.memory_space<smem>>
    %c0_i32 = arith.constant 0 : i32
    %c0_i32_0 = arith.constant 0 : i32
    %c0_i32_1 = arith.constant 0 : i32
    return %1, %c0_i32, %c0_i32_0 : i32, i32, i32
  }
  func.func @transform_4(%arg0: i32, %arg1: memref<4xi32, #tpu.memory_space<smem>>) -> (i32, i32, i32) {
    %0 = arith.index_cast %arg0 : i32 to index
    %1 = memref.load %arg1[%0] : memref<4xi32, #tpu.memory_space<smem>>
    %c0_i32 = arith.constant 0 : i32
    %c0_i32_0 = arith.constant 0 : i32
    %c0_i32_1 = arith.constant 0 : i32
    return %1, %c0_i32, %c0_i32_0 : i32, i32, i32
  }
  func.func @transform_5(%arg0: i32, %arg1: memref<4xi32, #tpu.memory_space<smem>>) -> (i32, i32) {
    %c0_i32 = arith.constant 0 : i32
    %c0_i32_0 = arith.constant 0 : i32
    return %arg0, %c0_i32 : i32, i32
  }
}

module attributes {stable_mosaic.version = 11 : i64} {
  func.func @_decoder_kernel(%arg0: i32, %arg1: memref<4xi32, #tpu.memory_space<smem>>, %arg2: memref<16x128xbf16, #tpu.memory_space<vmem>>, %arg3: memref<1x128x128xbf16, #tpu.memory_space<vmem>>, %arg4: memref<1x1x128xf32, #tpu.memory_space<vmem>>, %arg5: memref<1x128x128xbf16, #tpu.memory_space<vmem>>, %arg6: memref<1x1x128xf32, #tpu.memory_space<vmem>>, %arg7: memref<16x128xf32, #tpu.memory_space<vmem>>) attributes {dimension_semantics = [#tpu.dimension_semantics<parallel>], iteration_bounds = array<i64: 4>, scalar_prefetch = 1 : i64, scratch_operands = 0 : i64, tpu.core_type = #tpu.core_type<tc>, window_params = [{transform_indices = @transform_0, window_bounds = array<i64: 16, 128>}, {transform_indices = @transform_1, window_bounds = array<i64: 1, 128, 128>}, {transform_indices = @transform_2, window_bounds = array<i64: 1, 1, 128>}, {transform_indices = @transform_3, window_bounds = array<i64: 1, 128, 128>}, {transform_indices = @transform_4, window_bounds = array<i64: 1, 1, 128>}, {transform_indices = @transform_5, window_bounds = array<i64: 16, 128>}]} {
    %c0 = arith.constant 0 : index
    %c0_0 = arith.constant 0 : index
    %0 = vector.load %arg2[%c0, %c0_0] : memref<16x128xbf16, #tpu.memory_space<vmem>>, vector<16x128xbf16>
    %c0_1 = arith.constant 0 : index
    %c0_2 = arith.constant 0 : index
    %c0_3 = arith.constant 0 : index
    %1 = vector.load %arg3[%c0_1, %c0_2, %c0_3] : memref<1x128x128xbf16, #tpu.memory_space<vmem>>, vector<1x128x128xbf16>
    %2 = vector.shape_cast %1 : vector<1x128x128xbf16> to vector<128x128xbf16>
    %cst = arith.constant dense<0.000000e+00> : vector<16x128xf32>
    %3 = tpu.matmul %0, %2, %cst {dimension_numbers = #tpu.dot_dimension_numbers<[1], [0], [0], [1], [0, 0, 1, 1], [], []>} : vector<16x128xbf16>, vector<128x128xbf16>, vector<16x128xf32> -> vector<16x128xf32>
    %c0_4 = arith.constant 0 : index
    %c0_5 = arith.constant 0 : index
    %c0_6 = arith.constant 0 : index
    %4 = vector.load %arg4[%c0_4, %c0_5, %c0_6] : memref<1x1x128xf32, #tpu.memory_space<vmem>>, vector<1x1x128xf32>
    %5 = vector.shape_cast %4 : vector<1x1x128xf32> to vector<1x128xf32>
    %6 = vector.broadcast %5 : vector<1x128xf32> to vector<16x128xf32>
    %7 = arith.addf %3, %6 : vector<16x128xf32>
    %cst_7 = arith.constant 0.000000e+00 : f32
    %8 = vector.broadcast %cst_7 : f32 to vector<16x128xf32>
    %9 = arith.maximumf %7, %8 : vector<16x128xf32>
    %10 = arith.truncf %9 : vector<16x128xf32> to vector<16x128xbf16>
    %c0_8 = arith.constant 0 : index
    %c0_9 = arith.constant 0 : index
    %c0_10 = arith.constant 0 : index
    %11 = vector.load %arg5[%c0_8, %c0_9, %c0_10] : memref<1x128x128xbf16, #tpu.memory_space<vmem>>, vector<1x128x128xbf16>
    %12 = vector.shape_cast %11 : vector<1x128x128xbf16> to vector<128x128xbf16>
    %cst_11 = arith.constant dense<0.000000e+00> : vector<16x128xf32>
    %13 = tpu.matmul %10, %12, %cst_11 {dimension_numbers = #tpu.dot_dimension_numbers<[1], [0], [0], [1], [0, 0, 1, 1], [], []>} : vector<16x128xbf16>, vector<128x128xbf16>, vector<16x128xf32> -> vector<16x128xf32>
    %c0_12 = arith.constant 0 : index
    %c0_13 = arith.constant 0 : index
    %c0_14 = arith.constant 0 : index
    %14 = vector.load %arg6[%c0_12, %c0_13, %c0_14] : memref<1x1x128xf32, #tpu.memory_space<vmem>>, vector<1x1x128xf32>
    %15 = vector.shape_cast %14 : vector<1x1x128xf32> to vector<1x128xf32>
    %16 = vector.broadcast %15 : vector<1x128xf32> to vector<16x128xf32>
    %17 = arith.addf %13, %16 : vector<16x128xf32>
    %c0_15 = arith.constant 0 : index
    %c0_16 = arith.constant 0 : index
    %18 = vector.load %arg7[%c0_15, %c0_16] : memref<16x128xf32, #tpu.memory_space<vmem>>, vector<16x128xf32>
    tpu.vector_store %arg7[%c0_15, %c0_16], %17 {strides = array<i32>} : memref<16x128xf32, #tpu.memory_space<vmem>>, vector<16x128xf32>,
    return
  }
  func.func @transform_0(%arg0: i32, %arg1: memref<4xi32, #tpu.memory_space<smem>>) -> (i32, i32) {
    %c0_i32 = arith.constant 0 : i32
    %c0_i32_0 = arith.constant 0 : i32
    return %arg0, %c0_i32 : i32, i32
  }
  func.func @transform_1(%arg0: i32, %arg1: memref<4xi32, #tpu.memory_space<smem>>) -> (i32, i32, i32) {
    %0 = arith.index_cast %arg0 : i32 to index
    %1 = memref.load %arg1[%0] : memref<4xi32, #tpu.memory_space<smem>>
    %c0_i32 = arith.constant 0 : i32
    %c0_i32_0 = arith.constant 0 : i32
    %c0_i32_1 = arith.constant 0 : i32
    return %1, %c0_i32, %c0_i32_0 : i32, i32, i32
  }
  func.func @transform_2(%arg0: i32, %arg1: memref<4xi32, #tpu.memory_space<smem>>) -> (i32, i32, i32) {
    %0 = arith.index_cast %arg0 : i32 to index
    %1 = memref.load %arg1[%0] : memref<4xi32, #tpu.memory_space<smem>>
    %c0_i32 = arith.constant 0 : i32
    %c0_i32_0 = arith.constant 0 : i32
    %c0_i32_1 = arith.constant 0 : i32
    return %1, %c0_i32, %c0_i32_0 : i32, i32, i32
  }
  func.func @transform_3(%arg0: i32, %arg1: memref<4xi32, #tpu.memory_space<smem>>) -> (i32, i32, i32) {
    %0 = arith.index_cast %arg0 : i32 to index
    %1 = memref.load %arg1[%0] : memref<4xi32, #tpu.memory_space<smem>>
    %c0_i32 = arith.constant 0 : i32
    %c0_i32_0 = arith.constant 0 : i32
    %c0_i32_1 = arith.constant 0 : i32
    return %1, %c0_i32, %c0_i32_0 : i32, i32, i32
  }
  func.func @transform_4(%arg0: i32, %arg1: memref<4xi32, #tpu.memory_space<smem>>) -> (i32, i32, i32) {
    %0 = arith.index_cast %arg0 : i32 to index
    %1 = memref.load %arg1[%0] : memref<4xi32, #tpu.memory_space<smem>>
    %c0_i32 = arith.constant 0 : i32
    %c0_i32_0 = arith.constant 0 : i32
    %c0_i32_1 = arith.constant 0 : i32
    return %1, %c0_i32, %c0_i32_0 : i32, i32, i32
  }
  func.func @transform_5(%arg0: i32, %arg1: memref<4xi32, #tpu.memory_space<smem>>) -> (i32, i32) {
    %c0_i32 = arith.constant 0 : i32
    %c0_i32_0 = arith.constant 0 : i32
    return %arg0, %c0_i32 : i32, i32
  }
}

</mosaic_0001>

<llo_original>
// kernel: tpu_custom_call.1
$region0: #{tpu_custom_call.1}
  #allocation0 [shape = 'u32[]', space=smem, size = 0x4, offset = 0x4, fixed_abs, tag = 'smem constant byte address 0x4 - core index']
  #allocation1 [shape = 'u32[72,128]{1,0:T(1,128)}', space=vmem, size = 0x9000, scoped, tag = 'internal scratch']
  #allocation2 [shape = 's32[1]{0}', space=sflag, size = 0x4, scoped, tag = 'scoped memory for tpu_custom_call.1']
  #allocation3 [shape = 'u8[512]{0}', space=smem, size = 0x200, scoped, tag = 'prefetched SMEM operand 0']
  %s0 = inlined_call_operand.hbm [shape: s32[4], index: 0, kind: input, shape index: {}]
  %s1 = inlined_call_operand.hbm [shape: bf16[64,128], index: 1, kind: input, shape index: {}]
  %s2 = inlined_call_operand.hbm [shape: bf16[3,128,128], index: 2, kind: input, shape index: {}]
  %s3 = inlined_call_operand.hbm [shape: f32[3,1,128], index: 3, kind: input, shape index: {}]
  %s4 = inlined_call_operand.hbm [shape: bf16[3,128,128], index: 4, kind: input, shape index: {}]
  %s5 = inlined_call_operand.vmem [shape: f32[3,1,128], index: 5, kind: input, shape index: {}]
  %s6 = inlined_call_operand.hbm [shape: f32[64,128], index: 6, kind: output, shape index: {}]
  %s7 = sld [smem:[#allocation0]]
  $region69: #{tpu_custom_call.1} parent=0
    _
  %s9 = ssub.s32 1, %s7
  %s10 = scalar_select 0, %s9, %s7
  %s12 = sshll.u32 %s0, 4
  %s13 = int_to_ptr.hbm [resolvable:$true] %s12
  %15 = dma.hbm_to_smem %s13, 16, [#allocation3], [#allocation2]
  %17 = dma.done [#allocation2], 16
  %18 = sfence
  $region1: #{tpu_custom_call.1} parent=0
    #allocation4 [shape = 'u8[8192]{0}', space=vmem, size = 0x2000, scoped, tag = 'input window, operand 1']
    #allocation5 [shape = 's32[2]{0}', space=sflag, size = 0x8, scoped, tag = 'scoped memory for tpu_custom_call.1']
    #allocation6 [shape = 's32[2]{0}', space=sflag, size = 0x8, scoped, tag = 'scoped memory for tpu_custom_call.1']
    #allocation7 [shape = 'u8[32768]{0}', space=vmem, size = 0x8000, scoped, tag = 'input window, operand 2, single buffered']
    #allocation8 [shape = 's32[1]{0}', space=sflag, size = 0x4, scoped, tag = 'scoped memory for tpu_custom_call.1']
    #allocation9 [shape = 'u8[1024]{0}', space=vmem, size = 0x400, scoped, tag = 'input window, operand 3']
    #allocation10 [shape = 'u8[32768]{0}', space=vmem, size = 0x8000, scoped, tag = 'input window, operand 4, single buffered']
    #allocation11 [shape = 'u8[16384]{0}', space=vmem, size = 0x4000, scoped, tag = 'output window, operand 0']
    %19 = vsyncpa [#allocation5], 0
    %s20 = scalar_lea.sflag [#allocation5], 1
    %21 = vsyncpa %s20, 0
    %22 = vsyncpa [#allocation8], 0
    %23 = vsyncpa [#allocation6], 0
    %s24 = scalar_lea.sflag [#allocation6], 1
    %25 = vsyncpa %s24, 0
    loop: start=0, step=1, limit=6
    $region2: #{tpu_custom_call.1} parent=1 // loop_pre_header
      _
    $region3: #{tpu_custom_call.1} parent=1 // loop_header
      %s27 = sphi 0, %s31
      %p28 = scmp.ge.s32.totalorder %s27, 6
      %s37 = sphi 0, %s39
      %s40 = sphi 0, %s37
      %s41 = sphi 0, %s40
      %s57 = sphi 0, %s41
      %s65 = sphi 0, %s67
      %s68 = sphi 0, %s65
      %s69 = sphi 0, %s68
      %s85 = sphi 0, %s69
      %s93 = sphi 0, %s95
      %s96 = sphi 0, %s93
      %s97 = sphi 0, %s96
      %s113 = sphi 0, %s97
      %s121 = sphi 0, %s123
      %s124 = sphi 0, %s121
      %s125 = sphi 0, %s124
      %s141 = sphi 0, %s125
      %s149 = sphi 0, %s151
      %s152 = sphi 0, %s149
      %s153 = sphi 0, %s152
      %s169 = sphi 0, %s153
      %s175 = sphi 0, %s177
      %s178 = sphi 0, %s175
      %s179 = sphi 0, %s178
      %s195 = sphi 0, %s179
    $region4: #{tpu_custom_call.1} parent=1 // loop_header_branch
      %30 = sbr.rel (%p28) target = $region8
    $region5: #{tpu_custom_call.1} parent=1 // loop_body
      %s32 = ssub.s32 %s27, 1
      %s33 = ssub.s32 %s27, 2
      %s34 = sadd.s32 %s27, 1
      %s35 = ssub.s32 %s27, %s34
      %p36 = scmp.eq.s32.totalorder %s35, 0
      %s38 = sadd.s32 %s37, 1
      %s39 = scalar_select %p36, %s37, %s38
      %p42 = pneg %p36
      %p43 = scmp.eq.s32.totalorder %s27, 3
      %p44 = por %p42, %p43
      %p45 = scmp.ne.s32.totalorder %s37, %s40
      %p46 = scmp.eq.s32.totalorder %s27, 0
      %p47 = por %p45, %p46
      %p48 = scmp.ne.s32.totalorder %s37, %s40
      %p49 = scmp.eq.s32.totalorder %s32, 3
      %p50 = por %p48, %p49
      %p51 = scmp.ne.s32.totalorder %s40, %s41
      %p52 = scmp.eq.s32.totalorder %s32, 0
      %p53 = por %p51, %p52
      %p54 = scmp.ne.s32.totalorder %s40, %s41
      %p55 = scmp.eq.s32.totalorder %s33, 3
      %p56 = por %p54, %p55
      %p58 = scmp.ne.s32.totalorder %s41, %s57
      %p59 = scmp.eq.s32.totalorder %s33, 0
      %p60 = por %p58, %p59
      %s61 = sld [smem:[#allocation3 + %s27]]
      %s62 = sld [smem:[#allocation3 + %s34]]
      %s63 = ssub.s32 %s61, %s62
      %p64 = scmp.eq.s32.totalorder %s63, 0
      %s66 = sadd.s32 %s65, 1
      %s67 = scalar_select %p64, %s65, %s66
      %p70 = pneg %p64
      %p71 = scmp.eq.s32.totalorder %s27, 3
      %p72 = por %p70, %p71
      %p73 = scmp.ne.s32.totalorder %s65, %s68
      %p74 = scmp.eq.s32.totalorder %s27, 0
      %p75 = por %p73, %p74
      %p76 = scmp.ne.s32.totalorder %s65, %s68
      %p77 = scmp.eq.s32.totalorder %s32, 3
      %p78 = por %p76, %p77
      %p79 = scmp.ne.s32.totalorder %s68, %s69
      %p80 = scmp.eq.s32.totalorder %s32, 0
      %p81 = por %p79, %p80
      %p82 = scmp.ne.s32.totalorder %s68, %s69
      %p83 = scmp.eq.s32.totalorder %s33, 3
      %p84 = por %p82, %p83
      %p86 = scmp.ne.s32.totalorder %s69, %s85
      %p87 = scmp.eq.s32.totalorder %s33, 0
      %p88 = por %p86, %p87
      %s89 = sld [smem:[#allocation3 + %s27]]
      %s90 = sld [smem:[#allocation3 + %s34]]
      %s91 = ssub.s32 %s89, %s90
      %p92 = scmp.eq.s32.totalorder %s91, 0
      %s94 = sadd.s32 %s93, 1
      %s95 = scalar_select %p92, %s93, %s94
      %p98 = pneg %p92
      %p99 = scmp.eq.s32.totalorder %s27, 3
      %p100 = por %p98, %p99
      %p101 = scmp.ne.s32.totalorder %s93, %s96
      %p102 = scmp.eq.s32.totalorder %s27, 0
      %p103 = por %p101, %p102
      %p104 = scmp.ne.s32.totalorder %s93, %s96
      %p105 = scmp.eq.s32.totalorder %s32, 3
      %p106 = por %p104, %p105
      %p107 = scmp.ne.s32.totalorder %s96, %s97
      %p108 = scmp.eq.s32.totalorder %s32, 0
      %p109 = por %p107, %p108
      %p110 = scmp.ne.s32.totalorder %s96, %s97
      %p111 = scmp.eq.s32.totalorder %s33, 3
      %p112 = por %p110, %p111
      %p114 = scmp.ne.s32.totalorder %s97, %s113
      %p115 = scmp.eq.s32.totalorder %s33, 0
      %p116 = por %p114, %p115
      %s117 = sld [smem:[#allocation3 + %s27]]
      %s118 = sld [smem:[#allocation3 + %s34]]
      %s119 = ssub.s32 %s117, %s118
      %p120 = scmp.eq.s32.totalorder %s119, 0
      %s122 = sadd.s32 %s121, 1
      %s123 = scalar_select %p120, %s121, %s122
      %p126 = pneg %p120
      %p127 = scmp.eq.s32.totalorder %s27, 3
      %p128 = por %p126, %p127
      %p129 = scmp.ne.s32.totalorder %s121, %s124
      %p130 = scmp.eq.s32.totalorder %s27, 0
      %p131 = por %p129, %p130
      %p132 = scmp.ne.s32.totalorder %s121, %s124
      %p133 = scmp.eq.s32.totalorder %s32, 3
      %p134 = por %p132, %p133
      %p135 = scmp.ne.s32.totalorder %s124, %s125
      %p136 = scmp.eq.s32.totalorder %s32, 0
      %p137 = por %p135, %p136
      %p138 = scmp.ne.s32.totalorder %s124, %s125
      %p139 = scmp.eq.s32.totalorder %s33, 3
      %p140 = por %p138, %p139
      %p142 = scmp.ne.s32.totalorder %s125, %s141
      %p143 = scmp.eq.s32.totalorder %s33, 0
      %p144 = por %p142, %p143
      %s145 = sld [smem:[#allocation3 + %s27]]
      %s146 = sld [smem:[#allocation3 + %s34]]
      %s147 = ssub.s32 %s145, %s146
      %p148 = scmp.eq.s32.totalorder %s147, 0
      %s150 = sadd.s32 %s149, 1
      %s151 = scalar_select %p148, %s149, %s150
      %p154 = pneg %p148
      %p155 = scmp.eq.s32.totalorder %s27, 3
      %p156 = por %p154, %p155
      %p157 = scmp.ne.s32.totalorder %s149, %s152
      %p158 = scmp.eq.s32.totalorder %s27, 0
      %p159 = por %p157, %p158
      %p160 = scmp.ne.s32.totalorder %s149, %s152
      %p161 = scmp.eq.s32.totalorder %s32, 3
      %p162 = por %p160, %p161
      %p163 = scmp.ne.s32.totalorder %s152, %s153
      %p164 = scmp.eq.s32.totalorder %s32, 0
      %p165 = por %p163, %p164
      %p166 = scmp.ne.s32.totalorder %s152, %s153
      %p167 = scmp.eq.s32.totalorder %s33, 3
      %p168 = por %p166, %p167
      %p170 = scmp.ne.s32.totalorder %s153, %s169
      %p171 = scmp.eq.s32.totalorder %s33, 0
      %p172 = por %p170, %p171
      %s173 = ssub.s32 %s27, %s34
      %p174 = scmp.eq.s32.totalorder %s173, 0
      %s176 = sadd.s32 %s175, 1
      %s177 = scalar_select %p174, %s175, %s176
      %p180 = pneg %p174
      %p181 = scmp.eq.s32.totalorder %s27, 3
      %p182 = por %p180, %p181
      %p183 = scmp.ne.s32.totalorder %s175, %s178
      %p184 = scmp.eq.s32.totalorder %s27, 0
      %p185 = por %p183, %p184
      %p186 = scmp.ne.s32.totalorder %s175, %s178
      %p187 = scmp.eq.s32.totalorder %s32, 3
      %p188 = por %p186, %p187
      %p189 = scmp.ne.s32.totalorder %s178, %s179
      %p190 = scmp.eq.s32.totalorder %s32, 0
      %p191 = por %p189, %p190
      %p192 = scmp.ne.s32.totalorder %s178, %s179
      %p193 = scmp.eq.s32.totalorder %s33, 3
      %p194 = por %p192, %p193
      %p196 = scmp.ne.s32.totalorder %s179, %s195
      %p197 = scmp.eq.s32.totalorder %s33, 0
      %p198 = por %p196, %p197
      %p199 = scmp.le.s32.totalorder 1, %s27
      %p200 = scmp.lt.s32.totalorder %s27, 5
      %p201 = pnand %p199, %p200
      %p202 = pneg %p201
      // Predicated region
      $region9: #{tpu_custom_call.1} parent=5 // pred_check
        _
      $region10: #{tpu_custom_call.1} parent=5 // pred_check_branch
        %204 = sbr.rel (%p201) target = $region12
      $region11: #{tpu_custom_call.1} parent=5 // pred_region
        %s205 = ssub.s32 %s27, 1
        // Predicated region
        $region13: #{tpu_custom_call.1} parent=11 // pred_check
          %p206 = pneg %p81
        $region14: #{tpu_custom_call.1} parent=11 // pred_check_branch
          %208 = sbr.rel (%p206) target = $region16
        $region15: #{tpu_custom_call.1} parent=11 // pred_region
          %s209 = sld [smem:[#allocation3 + %s32]]
          %211 = vsyncadd [#allocation8], 0
          %s212 = smul.addr %s209, 16
          %s213 = smul.addr %s212, 4
          %s214 = scalar_lea.hbm %s2, %s213
          %s215 = sshll.u32 %s214, 4
          %s216 = int_to_ptr.hbm [resolvable:$true] %s215
          %s217 = sshll.u32 [#allocation7], 4
          %s218 = int_to_ptr.vmem [resolvable:$true] %s217
          %223 = dma.hbm_to_vmem [thread:$0]  %s216, 1024, %s218, [#allocation8], 64, 64, 4
        $region16: #{tpu_custom_call.1} parent=11 // pred_fallthru
          _
        // Predicated region
        $region17: #{tpu_custom_call.1} parent=11 // pred_check
          %p224 = pneg %p137
        $region18: #{tpu_custom_call.1} parent=11 // pred_check_branch
          %226 = sbr.rel (%p224) target = $region20
        $region19: #{tpu_custom_call.1} parent=11 // pred_region
          %s227 = sld [smem:[#allocation3 + %s32]]
          %229 = vsyncadd [#allocation8], 0
          %s230 = smul.addr %s227, 16
          %s231 = smul.addr %s230, 4
          %s232 = scalar_lea.hbm %s4, %s231
          %s233 = sshll.u32 %s232, 4
          %s234 = int_to_ptr.hbm [resolvable:$true] %s233
          %s235 = sshll.u32 [#allocation10], 4
          %s236 = int_to_ptr.vmem [resolvable:$true] %s235
          %241 = dma.hbm_to_vmem [thread:$0]  %s234, 1024, %s236, [#allocation8], 64, 64, 4
        $region20: #{tpu_custom_call.1} parent=11 // pred_fallthru
          _
      $region12: #{tpu_custom_call.1} parent=5 // pred_fallthru
        _
      %p242 = scmp.lt.s32.totalorder %s27, 4
      // Predicated region
      $region21: #{tpu_custom_call.1} parent=5 // pred_check
        %p243 = pneg %p242
      $region22: #{tpu_custom_call.1} parent=5 // pred_check_branch
        %245 = sbr.rel (%p243) target = $region24
      $region23: #{tpu_custom_call.1} parent=5 // pred_region
        // Predicated region
        $region25: #{tpu_custom_call.1} parent=23 // pred_check
          %p246 = pneg %p47
        $region26: #{tpu_custom_call.1} parent=23 // pred_check_branch
          %248 = sbr.rel (%p246) target = $region28
        $region27: #{tpu_custom_call.1} parent=23 // pred_region
          %s249 = sand.u32 %s27, 1
          %s250 = scalar_lea.sflag [#allocation5], %s249
          %s251 = sand.u32 %s37, 1
          %s252 = smul.addr %s251, 8
          %s253 = scalar_lea.vmem [#allocation4], %s252
          %s254 = smul.u32 2, %s27
          %256 = vsyncadd %s250, 0
          %s257 = smul.addr %s254, 4
          %s258 = scalar_lea.hbm %s1, %s257
          %s259 = sshll.u32 %s258, 4
          %s260 = int_to_ptr.hbm [resolvable:$true] %s259
          %s261 = sshll.u32 %s253, 4
          %s262 = int_to_ptr.vmem [resolvable:$true] %s261
          %267 = dma.hbm_to_vmem [thread:$0]  %s260, 128, %s262, %s250, 64, 64, 4
        $region28: #{tpu_custom_call.1} parent=23 // pred_fallthru
          _
        // Predicated region
        $region29: #{tpu_custom_call.1} parent=23 // pred_check
          %p268 = pneg %p103
        $region30: #{tpu_custom_call.1} parent=23 // pred_check_branch
          %270 = sbr.rel (%p268) target = $region32
        $region31: #{tpu_custom_call.1} parent=23 // pred_region
          %s271 = sand.u32 %s27, 1
          %s272 = scalar_lea.sflag [#allocation5], %s271
          %s273 = sand.u32 %s93, 1
          %s274 = scalar_lea.vmem [#allocation9], %s273
          %s275 = sld [smem:[#allocation3 + %s27]]
          %277 = vsyncadd %s272, 0
          %s278 = scalar_lea.hbm %s3, %s275
          %s280 = sshll.u32 %s278, 4
          %s281 = int_to_ptr.hbm [resolvable:$true] %s280
          %s282 = sshll.u32 %s274, 4
          %s283 = int_to_ptr.vmem [resolvable:$true] %s282
          %285 = dma.hbm_to_vmem [thread:$0]  %s281, 16, %s283, %s272
        $region32: #{tpu_custom_call.1} parent=23 // pred_fallthru
          _
        // Predicated region
        $region33: #{tpu_custom_call.1} parent=23 // pred_check
          %p286 = pneg %p159
        $region34: #{tpu_custom_call.1} parent=23 // pred_check_branch
          %288 = sbr.rel (%p286) target = $region36
        $region35: #{tpu_custom_call.1} parent=23 // pred_region
          %s289 = sld [smem:[#allocation3 + %s27]]
          %p290 = scmp.lt.s32.totalorder %s289, 2
          %s291 = scalar_select %p290, %s289, 2
          %s292 = scalar_lea.vmem %s5, %s291
          %s293 = sld [smem:[#allocation3 + %s27]]
        $region36: #{tpu_custom_call.1} parent=23 // pred_fallthru
          _
      $region24: #{tpu_custom_call.1} parent=5 // pred_fallthru
        _
      %p294 = scmp.le.s32.totalorder 1, %s27
      %p295 = scmp.lt.s32.totalorder %s27, 5
      %p296 = pnand %p294, %p295
      %p297 = pneg %p296
      // Predicated region
      $region37: #{tpu_custom_call.1} parent=5 // pred_check
        _
      $region38: #{tpu_custom_call.1} parent=5 // pred_check_branch
        %299 = sbr.rel (%p296) target = $region40
      $region39: #{tpu_custom_call.1} parent=5 // pred_region
        %s300 = ssub.s32 %s27, 1
        %s301 = sand.u32 %s32, 1
        %s302 = scalar_lea.sflag [#allocation5], %s301
        %s303 = sand.u32 %s40, 1
        %s304 = smul.addr %s303, 8
        %s305 = scalar_lea.vmem [#allocation4], %s304
        // Predicated region
        $region41: #{tpu_custom_call.1} parent=39 // pred_check
          %p306 = pneg %p53
        $region42: #{tpu_custom_call.1} parent=39 // pred_check_branch
          %308 = sbr.rel (%p306) target = $region44
        $region43: #{tpu_custom_call.1} parent=39 // pred_region
          %310 = dma.done %s302, 128
        $region44: #{tpu_custom_call.1} parent=39 // pred_fallthru
          _
        // Predicated region
        $region45: #{tpu_custom_call.1} parent=39 // pred_check
          %p311 = pneg %p81
        $region46: #{tpu_custom_call.1} parent=39 // pred_check_branch
          %313 = sbr.rel (%p311) target = $region48
        $region47: #{tpu_custom_call.1} parent=39 // pred_region
          %315 = dma.done [#allocation8], 1024
        $region48: #{tpu_custom_call.1} parent=39 // pred_fallthru
          _
        %s316 = sand.u32 %s32, 1
        %s317 = scalar_lea.sflag [#allocation5], %s316
        %s318 = sand.u32 %s96, 1
        %s319 = scalar_lea.vmem [#allocation9], %s318
        // Predicated region
        $region49: #{tpu_custom_call.1} parent=39 // pred_check
          %p320 = pneg %p109
        $region50: #{tpu_custom_call.1} parent=39 // pred_check_branch
          %322 = sbr.rel (%p320) target = $region52
        $region51: #{tpu_custom_call.1} parent=39 // pred_region
          %324 = dma.done %s317, 16
        $region52: #{tpu_custom_call.1} parent=39 // pred_fallthru
          _
        // Predicated region
        $region53: #{tpu_custom_call.1} parent=39 // pred_check
          %p325 = pneg %p137
        $region54: #{tpu_custom_call.1} parent=39 // pred_check_branch
          %327 = sbr.rel (%p325) target = $region56
        $region55: #{tpu_custom_call.1} parent=39 // pred_region
          %329 = dma.done [#allocation8], 1024
        $region56: #{tpu_custom_call.1} parent=39 // pred_fallthru
          _
        %s330 = sand.u32 %s32, 1
        %s331 = scalar_lea.sflag [#allocation5], %s330
        %s332 = sand.u32 %s40, 1
        %s333 = smul.addr %s332, 8
        %s334 = scalar_lea.vmem [#allocation4], %s333
        %p335 = pneg %p53
        %p336 = pneg %p50
        %p337 = pneg %p81
        %p338 = pneg %p78
        %s339 = sand.u32 %s32, 1
        %s340 = scalar_lea.sflag [#allocation5], %s339
        %s341 = sand.u32 %s96, 1
        %s342 = scalar_lea.vmem [#allocation9], %s341
        %p343 = pneg %p109
        %p344 = pneg %p106
        %p345 = pneg %p137
        %p346 = pneg %p134
        %s347 = sld [smem:[#allocation3 + %s32]]
        %p348 = scmp.lt.s32.totalorder %s347, 2
        %s349 = scalar_select %p348, %s347, 2
        %s350 = scalar_lea.vmem %s5, %s349
        %p351 = pneg %p165
        %p352 = pneg %p162
        %p353 = pneg %p191
        %p354 = pneg %p188
        %s355 = sand.u32 %s178, 1
        %s356 = scalar_lea.sflag [#allocation6], %s355
        %s357 = sand.u32 %s178, 1
        %s358 = smul.addr %s357, 16
        %s359 = scalar_lea.vmem [#allocation11], %s358
        %s360 = smul.u32 2, %s32
        %s361 = sld [smem:[#allocation3 + %s32]]
        %s362 = sld [smem:[#allocation3 + %s32]]
        %s363 = sld [smem:[#allocation3 + %s32]]
        %s364 = sld [smem:[#allocation3 + %s32]]
        %p365 = scmp.lt.s32.totalorder %s364, 2
        %s366 = scalar_select %p365, %s364, 2
        %s367 = scalar_lea.vmem %s5, %s366
        %s368 = sld [smem:[#allocation3 + %s32]]
        %s369 = smul.u32 2, %s32
        %v370 = vld [vmem:[%s305] sm:$0xf]
        %v371 = vld [vmem:[%s305 + $0x4] sm:$0xf]
        %v372 = vld [vmem:[#allocation7] sm:$0xf]
        %v373 = vld [vmem:[#allocation7 + $0x4] sm:$0xf]
        %v374 = vld [vmem:[#allocation7 + $0x8] sm:$0xf]
        %v375 = vld [vmem:[#allocation7 + $0xc] sm:$0xf]
        %v376 = vld [vmem:[#allocation7 + $0x10] sm:$0xf]
        %v377 = vld [vmem:[#allocation7 + $0x14] sm:$0xf]
        %v378 = vld [vmem:[#allocation7 + $0x18] sm:$0xf]
        %v379 = vld [vmem:[#allocation7 + $0x1c] sm:$0xf]
        %v380 = vld [vmem:[#allocation7 + $0x20] sm:$0xf]
        %v381 = vld [vmem:[#allocation7 + $0x24] sm:$0xf]
        %v382 = vld [vmem:[#allocation7 + $0x28] sm:$0xf]
        %v383 = vld [vmem:[#allocation7 + $0x2c] sm:$0xf]
        %v384 = vld [vmem:[#allocation7 + $0x30] sm:$0xf]
        %v385 = vld [vmem:[#allocation7 + $0x34] sm:$0xf]
        %v386 = vld [vmem:[#allocation7 + $0x38] sm:$0xf]
        %v387 = vld [vmem:[#allocation7 + $0x3c] sm:$0xf]
        %v388 = vld [vmem:[%s319] sm:$0x1]
        %v390 = vperm.slane %v388, 0
        %v394 = vunpack.c.l.b16 %v370
        %v395 = vunpack.c.l.b16 %v371
        %v396 = vpack.c.b16 %v395, %v394
        %v414 = vunpack.c.l.b16 %v372
        %v415 = vunpack.c.l.b16 %v373
        %v416 = vunpack.c.l.b16 %v374
        %v417 = vunpack.c.l.b16 %v375
        %v418 = vunpack.c.l.b16 %v376
        %v419 = vunpack.c.l.b16 %v377
        %v420 = vunpack.c.l.b16 %v378
        %v421 = vunpack.c.l.b16 %v379
        %v422 = vunpack.c.l.b16 %v380
        %v423 = vunpack.c.l.b16 %v381
        %v424 = vunpack.c.l.b16 %v382
        %v425 = vunpack.c.l.b16 %v383
        %v426 = vunpack.c.l.b16 %v384
        %v427 = vunpack.c.l.b16 %v385
        %v428 = vunpack.c.l.b16 %v386
        %v429 = vunpack.c.l.b16 %v387
        %v430 = vpack.c.b16 %v415, %v414
        %v431 = vpack.c.b16 %v417, %v416
        %v432 = vpack.c.b16 %v419, %v418
        %v433 = vpack.c.b16 %v421, %v420
        %v434 = vpack.c.b16 %v423, %v422
        %v435 = vpack.c.b16 %v425, %v424
        %v436 = vpack.c.b16 %v427, %v426
        %v437 = vpack.c.b16 %v429, %v428
        %446 = vmatpush.bf16.msra.mxu0 %v437
        %447 = vmatpush.bf16.msra.mxu0 %v436
        %448 = vmatpush.bf16.msra.mxu0 %v435
        %449 = vmatpush.bf16.msra.mxu0 %v434
        %450 = vmatpush.bf16.msra.mxu0 %v433
        %451 = vmatpush.bf16.msra.mxu0 %v432
        %452 = vmatpush.bf16.msra.mxu0 %v431
        %453 = vmatpush.bf16.msra.mxu0 %v430
        %454 = vmatmul.bf16.gmra.mxu0 %v396
        %v455 = vpop.f32.mrf.mxu0
        %v456 = vadd.f32 %v390, %v455
        %v457 = vpop.f32.mrf.mxu0
        %v458 = vadd.f32 %v390, %v457
        %459 = vdwg.mxu0
        %v460 = vmax.f32 %v456, 0.0
        %v461 = vmax.f32 %v458, 0.0
        %v462 = vpack.c.bf16 %v461, %v460
        %v463 = vld [vmem:[#allocation10] sm:$0xf]
        %v464 = vld [vmem:[#allocation10 + $0x4] sm:$0xf]
        %v465 = vld [vmem:[#allocation10 + $0x8] sm:$0xf]
        %v466 = vld [vmem:[#allocation10 + $0xc] sm:$0xf]
        %v467 = vld [vmem:[#allocation10 + $0x10] sm:$0xf]
        %v468 = vld [vmem:[#allocation10 + $0x14] sm:$0xf]
        %v469 = vld [vmem:[#allocation10 + $0x18] sm:$0xf]
        %v470 = vld [vmem:[#allocation10 + $0x1c] sm:$0xf]
        %v471 = vld [vmem:[#allocation10 + $0x20] sm:$0xf]
        %v472 = vld [vmem:[#allocation10 + $0x24] sm:$0xf]
        %v473 = vld [vmem:[#allocation10 + $0x28] sm:$0xf]
        %v474 = vld [vmem:[#allocation10 + $0x2c] sm:$0xf]
        %v475 = vld [vmem:[#allocation10 + $0x30] sm:$0xf]
        %v476 = vld [vmem:[#allocation10 + $0x34] sm:$0xf]
        %v477 = vld [vmem:[#allocation10 + $0x38] sm:$0xf]
        %v478 = vld [vmem:[#allocation10 + $0x3c] sm:$0xf]
        %v479 = vld [vmem:[%s367] sm:$0x1]
        %v481 = vperm.slane %v479, 0
        %v499 = vunpack.c.l.b16 %v463
        %v500 = vunpack.c.l.b16 %v464
        %v501 = vunpack.c.l.b16 %v465
        %v502 = vunpack.c.l.b16 %v466
        %v503 = vunpack.c.l.b16 %v467
        %v504 = vunpack.c.l.b16 %v468
        %v505 = vunpack.c.l.b16 %v469
        %v506 = vunpack.c.l.b16 %v470
        %v507 = vunpack.c.l.b16 %v471
        %v508 = vunpack.c.l.b16 %v472
        %v509 = vunpack.c.l.b16 %v473
        %v510 = vunpack.c.l.b16 %v474
        %v511 = vunpack.c.l.b16 %v475
        %v512 = vunpack.c.l.b16 %v476
        %v513 = vunpack.c.l.b16 %v477
        %v514 = vunpack.c.l.b16 %v478
        %v515 = vpack.c.b16 %v500, %v499
        %v516 = vpack.c.b16 %v502, %v501
        %v517 = vpack.c.b16 %v504, %v503
        %v518 = vpack.c.b16 %v506, %v505
        %v519 = vpack.c.b16 %v508, %v507
        %v520 = vpack.c.b16 %v510, %v509
        %v521 = vpack.c.b16 %v512, %v511
        %v522 = vpack.c.b16 %v514, %v513
        %531 = vmatpush.bf16.msra.mxu0 %v522
        %532 = vmatpush.bf16.msra.mxu0 %v521
        %533 = vmatpush.bf16.msra.mxu0 %v520
        %534 = vmatpush.bf16.msra.mxu0 %v519
        %535 = vmatpush.bf16.msra.mxu0 %v518
        %536 = vmatpush.bf16.msra.mxu0 %v517
        %537 = vmatpush.bf16.msra.mxu0 %v516
        %538 = vmatpush.bf16.msra.mxu0 %v515
        %539 = vmatmul.bf16.gmra.mxu0 %v462
        %v540 = vpop.f32.mrf.mxu0
        %v541 = vadd.f32 %v481, %v540
        %v542 = vpop.f32.mrf.mxu0
        %v543 = vadd.f32 %v481, %v542
        %544 = vdwg.mxu0
        %545 = vst [vmem:[%s359] sm:$0xff] %v541
        %546 = vst [vmem:[%s359 + $0x8] sm:$0xff] %v543
        %s547 = sand.u32 %s178, 1
        %s548 = scalar_lea.sflag [#allocation6], %s547
        %s549 = sand.u32 %s178, 1
        %s550 = smul.addr %s549, 16
        %s551 = scalar_lea.vmem [#allocation11], %s550
        // Predicated region
        $region57: #{tpu_custom_call.1} parent=39 // pred_check
          %p552 = pneg %p188
        $region58: #{tpu_custom_call.1} parent=39 // pred_check_branch
          %554 = sbr.rel (%p552) target = $region60
        $region59: #{tpu_custom_call.1} parent=39 // pred_region
          %s555 = smul.u32 2, %s32
          %557 = vsyncadd %s548, 0
          %s558 = smul.addr %s555, 8
          %s559 = scalar_lea.hbm %s6, %s558
          %s560 = sshll.u32 %s551, 4
          %s561 = int_to_ptr.vmem [resolvable:$true] %s560
          %s562 = sshll.u32 %s559, 4
          %s563 = int_to_ptr.hbm [resolvable:$true] %s562
          %568 = dma.vmem_to_hbm [thread:$0]  %s561, 256, %s563, %s548, 128, 128, 8
        $region60: #{tpu_custom_call.1} parent=39 // pred_fallthru
          _
      $region40: #{tpu_custom_call.1} parent=5 // pred_fallthru
        _
      %p569 = scmp.le.s32.totalorder 2, %s27
      // Predicated region
      $region61: #{tpu_custom_call.1} parent=5 // pred_check
        %p570 = pneg %p569
      $region62: #{tpu_custom_call.1} parent=5 // pred_check_branch
        %572 = sbr.rel (%p570) target = $region64
      $region63: #{tpu_custom_call.1} parent=5 // pred_region
        %s573 = ssub.s32 %s27, 2
        // Predicated region
        $region65: #{tpu_custom_call.1} parent=63 // pred_check
          %p574 = pneg %p194
        $region66: #{tpu_custom_call.1} parent=63 // pred_check_branch
          %576 = sbr.rel (%p574) target = $region68
        $region67: #{tpu_custom_call.1} parent=63 // pred_region
          %s577 = sand.u32 %s179, 1
          %s578 = scalar_lea.sflag [#allocation6], %s577
          %s579 = sand.u32 %s179, 1
          %s580 = smul.addr %s579, 16
          %s581 = scalar_lea.vmem [#allocation11], %s580
          %583 = dma.done %s578, 256
        $region68: #{tpu_custom_call.1} parent=63 // pred_fallthru
          _
      $region64: #{tpu_custom_call.1} parent=5 // pred_fallthru
        _
    $region6: #{tpu_custom_call.1} parent=1 // loop_footer
      %s31 = sadd.s32 1, %s27
    $region7: #{tpu_custom_call.1} parent=1 // loop_footer_branch
      %26 = sbr.rel target = $region3
    $region8: #{tpu_custom_call.1} parent=1 // loop_exit
      _
    %584 = vsyncpa [#allocation5], 1
    %s585 = scalar_lea.sflag [#allocation5], 1
    %586 = vsyncpa %s585, 1
    %587 = vsyncpa [#allocation8], 1
    %588 = vsyncpa [#allocation6], 1
    %s589 = scalar_lea.sflag [#allocation6], 1
    %590 = vsyncpa %s589, 1

// kernel: tpu_custom_call.1
$region0: #{tpu_custom_call.1}
  #allocation0 [shape = 'u32[]', space=smem, size = 0x4, offset = 0x4, fixed_abs, tag = 'smem constant byte address 0x4 - core index']
  #allocation1 [shape = 'u32[72,128]{1,0:T(1,128)}', space=vmem, size = 0x9000, scoped, tag = 'internal scratch']
  #allocation2 [shape = 's32[1]{0}', space=sflag, size = 0x4, scoped, tag = 'scoped memory for tpu_custom_call.1']
  #allocation3 [shape = 'u8[512]{0}', space=smem, size = 0x200, scoped, tag = 'prefetched SMEM operand 0']
  %s0 = inlined_call_operand.hbm [shape: s32[4], index: 0, kind: input, shape index: {}]
  %s1 = inlined_call_operand.hbm [shape: bf16[64,128], index: 1, kind: input, shape index: {}]
  %s2 = inlined_call_operand.hbm [shape: bf16[3,128,128], index: 2, kind: input, shape index: {}]
  %s3 = inlined_call_operand.hbm [shape: f32[3,1,128], index: 3, kind: input, shape index: {}]
  %s4 = inlined_call_operand.hbm [shape: bf16[3,128,128], index: 4, kind: input, shape index: {}]
  %s5 = inlined_call_operand.vmem [shape: f32[3,1,128], index: 5, kind: input, shape index: {}]
  %s6 = inlined_call_operand.hbm [shape: f32[64,128], index: 6, kind: output, shape index: {}]
  %s7 = sld [smem:[#allocation0]]
  $region69: #{tpu_custom_call.1} parent=0
    _
  %s9 = ssub.s32 1, %s7
  %s10 = scalar_select 0, %s9, %s7
  %s12 = sshll.u32 %s0, 4
  %s13 = int_to_ptr.hbm [resolvable:$true] %s12
  %15 = dma.hbm_to_smem %s13, 16, [#allocation3], [#allocation2]
  %17 = dma.done [#allocation2], 16
  %18 = sfence
  $region1: #{tpu_custom_call.1} parent=0
    #allocation4 [shape = 'u8[8192]{0}', space=vmem, size = 0x2000, scoped, tag = 'input window, operand 1']
    #allocation5 [shape = 's32[2]{0}', space=sflag, size = 0x8, scoped, tag = 'scoped memory for tpu_custom_call.1']
    #allocation6 [shape = 's32[2]{0}', space=sflag, size = 0x8, scoped, tag = 'scoped memory for tpu_custom_call.1']
    #allocation7 [shape = 'u8[65536]{0}', space=vmem, size = 0x10000, scoped, tag = 'input window, operand 2']
    #allocation8 [shape = 's32[2]{0}', space=sflag, size = 0x8, scoped, tag = 'scoped memory for tpu_custom_call.1']
    #allocation9 [shape = 'u8[1024]{0}', space=vmem, size = 0x400, scoped, tag = 'input window, operand 3']
    #allocation10 [shape = 'u8[65536]{0}', space=vmem, size = 0x10000, scoped, tag = 'input window, operand 4']
    #allocation11 [shape = 's32[2]{0}', space=sflag, size = 0x8, scoped, tag = 'scoped memory for tpu_custom_call.1']
    #allocation12 [shape = 'u8[16384]{0}', space=vmem, size = 0x4000, scoped, tag = 'output window, operand 0']
    %19 = vsyncpa [#allocation5], 0
    %s20 = scalar_lea.sflag [#allocation5], 1
    %21 = vsyncpa %s20, 0
    %22 = vsyncpa [#allocation8], 0
    %s23 = scalar_lea.sflag [#allocation8], 1
    %24 = vsyncpa %s23, 0
    %25 = vsyncpa [#allocation11], 0
    %s26 = scalar_lea.sflag [#allocation11], 1
    %27 = vsyncpa %s26, 0
    %28 = vsyncpa [#allocation6], 0
    %s29 = scalar_lea.sflag [#allocation6], 1
    %30 = vsyncpa %s29, 0
    loop: start=0, step=1, limit=6
    $region2: #{tpu_custom_call.1} parent=1 // loop_pre_header
      _
    $region3: #{tpu_custom_call.1} parent=1 // loop_header
      %s32 = sphi 0, %s36
      %p33 = scmp.ge.s32.totalorder %s32, 6
      %s42 = sphi 0, %s44
      %s45 = sphi 0, %s42
      %s46 = sphi 0, %s45
      %s62 = sphi 0, %s46
      %s70 = sphi 0, %s72
      %s73 = sphi 0, %s70
      %s74 = sphi 0, %s73
      %s90 = sphi 0, %s74
      %s98 = sphi 0, %s100
      %s101 = sphi 0, %s98
      %s102 = sphi 0, %s101
      %s118 = sphi 0, %s102
      %s126 = sphi 0, %s128
      %s129 = sphi 0, %s126
      %s130 = sphi 0, %s129
      %s146 = sphi 0, %s130
      %s154 = sphi 0, %s156
      %s157 = sphi 0, %s154
      %s158 = sphi 0, %s157
      %s174 = sphi 0, %s158
      %s180 = sphi 0, %s182
      %s183 = sphi 0, %s180
      %s184 = sphi 0, %s183
      %s200 = sphi 0, %s184
    $region4: #{tpu_custom_call.1} parent=1 // loop_header_branch
      %35 = sbr.rel (%p33) target = $region8
    $region5: #{tpu_custom_call.1} parent=1 // loop_body
      %s37 = ssub.s32 %s32, 1
      %s38 = ssub.s32 %s32, 2
      %s39 = sadd.s32 %s32, 1
      %s40 = ssub.s32 %s32, %s39
      %p41 = scmp.eq.s32.totalorder %s40, 0
      %s43 = sadd.s32 %s42, 1
      %s44 = scalar_select %p41, %s42, %s43
      %p47 = pneg %p41
      %p48 = scmp.eq.s32.totalorder %s32, 3
      %p49 = por %p47, %p48
      %p50 = scmp.ne.s32.totalorder %s42, %s45
      %p51 = scmp.eq.s32.totalorder %s32, 0
      %p52 = por %p50, %p51
      %p53 = scmp.ne.s32.totalorder %s42, %s45
      %p54 = scmp.eq.s32.totalorder %s37, 3
      %p55 = por %p53, %p54
      %p56 = scmp.ne.s32.totalorder %s45, %s46
      %p57 = scmp.eq.s32.totalorder %s37, 0
      %p58 = por %p56, %p57
      %p59 = scmp.ne.s32.totalorder %s45, %s46
      %p60 = scmp.eq.s32.totalorder %s38, 3
      %p61 = por %p59, %p60
      %p63 = scmp.ne.s32.totalorder %s46, %s62
      %p64 = scmp.eq.s32.totalorder %s38, 0
      %p65 = por %p63, %p64
      %s66 = sld [smem:[#allocation3 + %s32]]
      %s67 = sld [smem:[#allocation3 + %s39]]
      %s68 = ssub.s32 %s66, %s67
      %p69 = scmp.eq.s32.totalorder %s68, 0
      %s71 = sadd.s32 %s70, 1
      %s72 = scalar_select %p69, %s70, %s71
      %p75 = pneg %p69
      %p76 = scmp.eq.s32.totalorder %s32, 3
      %p77 = por %p75, %p76
      %p78 = scmp.ne.s32.totalorder %s70, %s73
      %p79 = scmp.eq.s32.totalorder %s32, 0
      %p80 = por %p78, %p79
      %p81 = scmp.ne.s32.totalorder %s70, %s73
      %p82 = scmp.eq.s32.totalorder %s37, 3
      %p83 = por %p81, %p82
      %p84 = scmp.ne.s32.totalorder %s73, %s74
      %p85 = scmp.eq.s32.totalorder %s37, 0
      %p86 = por %p84, %p85
      %p87 = scmp.ne.s32.totalorder %s73, %s74
      %p88 = scmp.eq.s32.totalorder %s38, 3
      %p89 = por %p87, %p88
      %p91 = scmp.ne.s32.totalorder %s74, %s90
      %p92 = scmp.eq.s32.totalorder %s38, 0
      %p93 = por %p91, %p92
      %s94 = sld [smem:[#allocation3 + %s32]]
      %s95 = sld [smem:[#allocation3 + %s39]]
      %s96 = ssub.s32 %s94, %s95
      %p97 = scmp.eq.s32.totalorder %s96, 0
      %s99 = sadd.s32 %s98, 1
      %s100 = scalar_select %p97, %s98, %s99
      %p103 = pneg %p97
      %p104 = scmp.eq.s32.totalorder %s32, 3
      %p105 = por %p103, %p104
      %p106 = scmp.ne.s32.totalorder %s98, %s101
      %p107 = scmp.eq.s32.totalorder %s32, 0
      %p108 = por %p106, %p107
      %p109 = scmp.ne.s32.totalorder %s98, %s101
      %p110 = scmp.eq.s32.totalorder %s37, 3
      %p111 = por %p109, %p110
      %p112 = scmp.ne.s32.totalorder %s101, %s102
      %p113 = scmp.eq.s32.totalorder %s37, 0
      %p114 = por %p112, %p113
      %p115 = scmp.ne.s32.totalorder %s101, %s102
      %p116 = scmp.eq.s32.totalorder %s38, 3
      %p117 = por %p115, %p116
      %p119 = scmp.ne.s32.totalorder %s102, %s118
      %p120 = scmp.eq.s32.totalorder %s38, 0
      %p121 = por %p119, %p120
      %s122 = sld [smem:[#allocation3 + %s32]]
      %s123 = sld [smem:[#allocation3 + %s39]]
      %s124 = ssub.s32 %s122, %s123
      %p125 = scmp.eq.s32.totalorder %s124, 0
      %s127 = sadd.s32 %s126, 1
      %s128 = scalar_select %p125, %s126, %s127
      %p131 = pneg %p125
      %p132 = scmp.eq.s32.totalorder %s32, 3
      %p133 = por %p131, %p132
      %p134 = scmp.ne.s32.totalorder %s126, %s129
      %p135 = scmp.eq.s32.totalorder %s32, 0
      %p136 = por %p134, %p135
      %p137 = scmp.ne.s32.totalorder %s126, %s129
      %p138 = scmp.eq.s32.totalorder %s37, 3
      %p139 = por %p137, %p138
      %p140 = scmp.ne.s32.totalorder %s129, %s130
      %p141 = scmp.eq.s32.totalorder %s37, 0
      %p142 = por %p140, %p141
      %p143 = scmp.ne.s32.totalorder %s129, %s130
      %p144 = scmp.eq.s32.totalorder %s38, 3
      %p145 = por %p143, %p144
      %p147 = scmp.ne.s32.totalorder %s130, %s146
      %p148 = scmp.eq.s32.totalorder %s38, 0
      %p149 = por %p147, %p148
      %s150 = sld [smem:[#allocation3 + %s32]]
      %s151 = sld [smem:[#allocation3 + %s39]]
      %s152 = ssub.s32 %s150, %s151
      %p153 = scmp.eq.s32.totalorder %s152, 0
      %s155 = sadd.s32 %s154, 1
      %s156 = scalar_select %p153, %s154, %s155
      %p159 = pneg %p153
      %p160 = scmp.eq.s32.totalorder %s32, 3
      %p161 = por %p159, %p160
      %p162 = scmp.ne.s32.totalorder %s154, %s157
      %p163 = scmp.eq.s32.totalorder %s32, 0
      %p164 = por %p162, %p163
      %p165 = scmp.ne.s32.totalorder %s154, %s157
      %p166 = scmp.eq.s32.totalorder %s37, 3
      %p167 = por %p165, %p166
      %p168 = scmp.ne.s32.totalorder %s157, %s158
      %p169 = scmp.eq.s32.totalorder %s37, 0
      %p170 = por %p168, %p169
      %p171 = scmp.ne.s32.totalorder %s157, %s158
      %p172 = scmp.eq.s32.totalorder %s38, 3
      %p173 = por %p171, %p172
      %p175 = scmp.ne.s32.totalorder %s158, %s174
      %p176 = scmp.eq.s32.totalorder %s38, 0
      %p177 = por %p175, %p176
      %s178 = ssub.s32 %s32, %s39
      %p179 = scmp.eq.s32.totalorder %s178, 0
      %s181 = sadd.s32 %s180, 1
      %s182 = scalar_select %p179, %s180, %s181
      %p185 = pneg %p179
      %p186 = scmp.eq.s32.totalorder %s32, 3
      %p187 = por %p185, %p186
      %p188 = scmp.ne.s32.totalorder %s180, %s183
      %p189 = scmp.eq.s32.totalorder %s32, 0
      %p190 = por %p188, %p189
      %p191 = scmp.ne.s32.totalorder %s180, %s183
      %p192 = scmp.eq.s32.totalorder %s37, 3
      %p193 = por %p191, %p192
      %p194 = scmp.ne.s32.totalorder %s183, %s184
      %p195 = scmp.eq.s32.totalorder %s37, 0
      %p196 = por %p194, %p195
      %p197 = scmp.ne.s32.totalorder %s183, %s184
      %p198 = scmp.eq.s32.totalorder %s38, 3
      %p199 = por %p197, %p198
      %p201 = scmp.ne.s32.totalorder %s184, %s200
      %p202 = scmp.eq.s32.totalorder %s38, 0
      %p203 = por %p201, %p202
      %p204 = scmp.le.s32.totalorder 1, %s32
      %p205 = scmp.lt.s32.totalorder %s32, 5
      %p206 = pnand %p204, %p205
      %p207 = pneg %p206
      // Predicated region
      $region9: #{tpu_custom_call.1} parent=5 // pred_check
        _
      $region10: #{tpu_custom_call.1} parent=5 // pred_check_branch
        %209 = sbr.rel (%p206) target = $region12
      $region11: #{tpu_custom_call.1} parent=5 // pred_region
        %s210 = ssub.s32 %s32, 1
      $region12: #{tpu_custom_call.1} parent=5 // pred_fallthru
        _
      %p211 = scmp.lt.s32.totalorder %s32, 4
      // Predicated region
      $region13: #{tpu_custom_call.1} parent=5 // pred_check
        %p212 = pneg %p211
      $region14: #{tpu_custom_call.1} parent=5 // pred_check_branch
        %214 = sbr.rel (%p212) target = $region16
      $region15: #{tpu_custom_call.1} parent=5 // pred_region
        // Predicated region
        $region17: #{tpu_custom_call.1} parent=15 // pred_check
          %p215 = pneg %p52
        $region18: #{tpu_custom_call.1} parent=15 // pred_check_branch
          %217 = sbr.rel (%p215) target = $region20
        $region19: #{tpu_custom_call.1} parent=15 // pred_region
          %s218 = sand.u32 %s42, 1
          %s219 = scalar_lea.sflag [#allocation5], %s218
          %s220 = sand.u32 %s42, 1
          %s221 = smul.addr %s220, 8
          %s222 = scalar_lea.vmem [#allocation4], %s221
          %s223 = smul.u32 2, %s32
          %225 = vsyncadd %s219, 0
          %s226 = smul.addr %s223, 4
          %s227 = scalar_lea.hbm %s1, %s226
          %s228 = sshll.u32 %s227, 4
          %s229 = int_to_ptr.hbm [resolvable:$true] %s228
          %s230 = sshll.u32 %s222, 4
          %s231 = int_to_ptr.vmem [resolvable:$true] %s230
          %236 = dma.hbm_to_vmem [thread:$0]  %s229, 128, %s231, %s219, 64, 64, 4
        $region20: #{tpu_custom_call.1} parent=15 // pred_fallthru
          _
        // Predicated region
        $region21: #{tpu_custom_call.1} parent=15 // pred_check
          %p237 = pneg %p80
        $region22: #{tpu_custom_call.1} parent=15 // pred_check_branch
          %239 = sbr.rel (%p237) target = $region24
        $region23: #{tpu_custom_call.1} parent=15 // pred_region
          %s240 = sand.u32 %s32, 1
          %s241 = scalar_lea.sflag [#allocation8], %s240
          %s242 = sand.u32 %s70, 1
          %s243 = smul.addr %s242, 64
          %s244 = scalar_lea.vmem [#allocation7], %s243
          %s245 = sld [smem:[#allocation3 + %s32]]
          %247 = vsyncadd %s241, 0
          %s248 = smul.addr %s245, 16
          %s249 = smul.addr %s248, 4
          %s250 = scalar_lea.hbm %s2, %s249
          %s251 = sshll.u32 %s250, 4
          %s252 = int_to_ptr.hbm [resolvable:$true] %s251
          %s253 = sshll.u32 %s244, 4
          %s254 = int_to_ptr.vmem [resolvable:$true] %s253
          %259 = dma.hbm_to_vmem [thread:$0]  %s252, 1024, %s254, %s241, 64, 64, 4
        $region24: #{tpu_custom_call.1} parent=15 // pred_fallthru
          _
        // Predicated region
        $region25: #{tpu_custom_call.1} parent=15 // pred_check
          %p260 = pneg %p108
        $region26: #{tpu_custom_call.1} parent=15 // pred_check_branch
          %262 = sbr.rel (%p260) target = $region28
        $region27: #{tpu_custom_call.1} parent=15 // pred_region
          %s263 = sand.u32 %s32, 1
          %s264 = scalar_lea.sflag [#allocation8], %s263
          %s265 = sand.u32 %s98, 1
          %s266 = scalar_lea.vmem [#allocation9], %s265
          %s267 = sld [smem:[#allocation3 + %s32]]
          %269 = vsyncadd %s264, 0
          %s270 = scalar_lea.hbm %s3, %s267
          %s272 = sshll.u32 %s270, 4
          %s273 = int_to_ptr.hbm [resolvable:$true] %s272
          %s274 = sshll.u32 %s266, 4
          %s275 = int_to_ptr.vmem [resolvable:$true] %s274
          %277 = dma.hbm_to_vmem [thread:$0]  %s273, 16, %s275, %s264
        $region28: #{tpu_custom_call.1} parent=15 // pred_fallthru
          _
        // Predicated region
        $region29: #{tpu_custom_call.1} parent=15 // pred_check
          %p278 = pneg %p136
        $region30: #{tpu_custom_call.1} parent=15 // pred_check_branch
          %280 = sbr.rel (%p278) target = $region32
        $region31: #{tpu_custom_call.1} parent=15 // pred_region
          %s281 = sand.u32 %s126, 1
          %s282 = scalar_lea.sflag [#allocation11], %s281
          %s283 = sand.u32 %s126, 1
          %s284 = smul.addr %s283, 64
          %s285 = scalar_lea.vmem [#allocation10], %s284
          %s286 = sld [smem:[#allocation3 + %s32]]
          %288 = vsyncadd %s282, 0
          %s289 = smul.addr %s286, 16
          %s290 = smul.addr %s289, 4
          %s291 = scalar_lea.hbm %s4, %s290
          %s292 = sshll.u32 %s291, 4
          %s293 = int_to_ptr.hbm [resolvable:$true] %s292
          %s294 = sshll.u32 %s285, 4
          %s295 = int_to_ptr.vmem [resolvable:$true] %s294
          %300 = dma.hbm_to_vmem [thread:$0]  %s293, 1024, %s295, %s282, 64, 64, 4
        $region32: #{tpu_custom_call.1} parent=15 // pred_fallthru
          _
        // Predicated region
        $region33: #{tpu_custom_call.1} parent=15 // pred_check
          %p301 = pneg %p164
        $region34: #{tpu_custom_call.1} parent=15 // pred_check_branch
          %303 = sbr.rel (%p301) target = $region36
        $region35: #{tpu_custom_call.1} parent=15 // pred_region
          %s304 = sld [smem:[#allocation3 + %s32]]
          %p305 = scmp.lt.s32.totalorder %s304, 2
          %s306 = scalar_select %p305, %s304, 2
          %s307 = scalar_lea.vmem %s5, %s306
          %s308 = sld [smem:[#allocation3 + %s32]]
        $region36: #{tpu_custom_call.1} parent=15 // pred_fallthru
          _
      $region16: #{tpu_custom_call.1} parent=5 // pred_fallthru
        _
      %p309 = scmp.le.s32.totalorder 1, %s32
      %p310 = scmp.lt.s32.totalorder %s32, 5
      %p311 = pnand %p309, %p310
      %p312 = pneg %p311
      // Predicated region
      $region37: #{tpu_custom_call.1} parent=5 // pred_check
        _
      $region38: #{tpu_custom_call.1} parent=5 // pred_check_branch
        %314 = sbr.rel (%p311) target = $region40
      $region39: #{tpu_custom_call.1} parent=5 // pred_region
        %s315 = ssub.s32 %s32, 1
        %s316 = sand.u32 %s45, 1
        %s317 = scalar_lea.sflag [#allocation5], %s316
        %s318 = sand.u32 %s45, 1
        %s319 = smul.addr %s318, 8
        %s320 = scalar_lea.vmem [#allocation4], %s319
        // Predicated region
        $region41: #{tpu_custom_call.1} parent=39 // pred_check
          %p321 = pneg %p58
        $region42: #{tpu_custom_call.1} parent=39 // pred_check_branch
          %323 = sbr.rel (%p321) target = $region44
        $region43: #{tpu_custom_call.1} parent=39 // pred_region
          %325 = dma.done %s317, 128
        $region44: #{tpu_custom_call.1} parent=39 // pred_fallthru
          _
        %s326 = sand.u32 %s37, 1
        %s327 = scalar_lea.sflag [#allocation8], %s326
        %s328 = sand.u32 %s73, 1
        %s329 = smul.addr %s328, 64
        %s330 = scalar_lea.vmem [#allocation7], %s329
        // Predicated region
        $region45: #{tpu_custom_call.1} parent=39 // pred_check
          %p331 = pneg %p86
        $region46: #{tpu_custom_call.1} parent=39 // pred_check_branch
          %333 = sbr.rel (%p331) target = $region48
        $region47: #{tpu_custom_call.1} parent=39 // pred_region
          %335 = dma.done %s327, 1024
        $region48: #{tpu_custom_call.1} parent=39 // pred_fallthru
          _
        %s336 = sand.u32 %s37, 1
        %s337 = scalar_lea.sflag [#allocation8], %s336
        %s338 = sand.u32 %s101, 1
        %s339 = scalar_lea.vmem [#allocation9], %s338
        // Predicated region
        $region49: #{tpu_custom_call.1} parent=39 // pred_check
          %p340 = pneg %p114
        $region50: #{tpu_custom_call.1} parent=39 // pred_check_branch
          %342 = sbr.rel (%p340) target = $region52
        $region51: #{tpu_custom_call.1} parent=39 // pred_region
          %344 = dma.done %s337, 16
        $region52: #{tpu_custom_call.1} parent=39 // pred_fallthru
          _
        %s345 = sand.u32 %s129, 1
        %s346 = scalar_lea.sflag [#allocation11], %s345
        %s347 = sand.u32 %s129, 1
        %s348 = smul.addr %s347, 64
        %s349 = scalar_lea.vmem [#allocation10], %s348
        // Predicated region
        $region53: #{tpu_custom_call.1} parent=39 // pred_check
          %p350 = pneg %p142
        $region54: #{tpu_custom_call.1} parent=39 // pred_check_branch
          %352 = sbr.rel (%p350) target = $region56
        $region55: #{tpu_custom_call.1} parent=39 // pred_region
          %354 = dma.done %s346, 1024
        $region56: #{tpu_custom_call.1} parent=39 // pred_fallthru
          _
        %s355 = sand.u32 %s45, 1
        %s356 = scalar_lea.sflag [#allocation5], %s355
        %s357 = sand.u32 %s45, 1
        %s358 = smul.addr %s357, 8
        %s359 = scalar_lea.vmem [#allocation4], %s358
        %p360 = pneg %p58
        %p361 = pneg %p55
        %s362 = sand.u32 %s37, 1
        %s363 = scalar_lea.sflag [#allocation8], %s362
        %s364 = sand.u32 %s73, 1
        %s365 = smul.addr %s364, 64
        %s366 = scalar_lea.vmem [#allocation7], %s365
        %p367 = pneg %p86
        %p368 = pneg %p83
        %s369 = sand.u32 %s37, 1
        %s370 = scalar_lea.sflag [#allocation8], %s369
        %s371 = sand.u32 %s101, 1
        %s372 = scalar_lea.vmem [#allocation9], %s371
        %p373 = pneg %p114
        %p374 = pneg %p111
        %s375 = sand.u32 %s129, 1
        %s376 = scalar_lea.sflag [#allocation11], %s375
        %s377 = sand.u32 %s129, 1
        %s378 = smul.addr %s377, 64
        %s379 = scalar_lea.vmem [#allocation10], %s378
        %p380 = pneg %p142
        %p381 = pneg %p139
        %s382 = sld [smem:[#allocation3 + %s37]]
        %p383 = scmp.lt.s32.totalorder %s382, 2
        %s384 = scalar_select %p383, %s382, 2
        %s385 = scalar_lea.vmem %s5, %s384
        %p386 = pneg %p170
        %p387 = pneg %p167
        %p388 = pneg %p196
        %p389 = pneg %p193
        %s390 = sand.u32 %s183, 1
        %s391 = scalar_lea.sflag [#allocation6], %s390
        %s392 = sand.u32 %s183, 1
        %s393 = smul.addr %s392, 16
        %s394 = scalar_lea.vmem [#allocation12], %s393
        %s395 = smul.u32 2, %s37
        %s396 = sld [smem:[#allocation3 + %s37]]
        %s397 = sld [smem:[#allocation3 + %s37]]
        %s398 = sld [smem:[#allocation3 + %s37]]
        %s399 = sld [smem:[#allocation3 + %s37]]
        %p400 = scmp.lt.s32.totalorder %s399, 2
        %s401 = scalar_select %p400, %s399, 2
        %s402 = scalar_lea.vmem %s5, %s401
        %s403 = sld [smem:[#allocation3 + %s37]]
        %s404 = smul.u32 2, %s37
        %v405 = vld [vmem:[%s320] sm:$0xf]
        %v406 = vld [vmem:[%s320 + $0x4] sm:$0xf]
        %v407 = vld [vmem:[%s330] sm:$0xf]
        %v408 = vld [vmem:[%s330 + $0x4] sm:$0xf]
        %v409 = vld [vmem:[%s330 + $0x8] sm:$0xf]
        %v410 = vld [vmem:[%s330 + $0xc] sm:$0xf]
        %v411 = vld [vmem:[%s330 + $0x10] sm:$0xf]
        %v412 = vld [vmem:[%s330 + $0x14] sm:$0xf]
        %v413 = vld [vmem:[%s330 + $0x18] sm:$0xf]
        %v414 = vld [vmem:[%s330 + $0x1c] sm:$0xf]
        %v415 = vld [vmem:[%s330 + $0x20] sm:$0xf]
        %v416 = vld [vmem:[%s330 + $0x24] sm:$0xf]
        %v417 = vld [vmem:[%s330 + $0x28] sm:$0xf]
        %v418 = vld [vmem:[%s330 + $0x2c] sm:$0xf]
        %v419 = vld [vmem:[%s330 + $0x30] sm:$0xf]
        %v420 = vld [vmem:[%s330 + $0x34] sm:$0xf]
        %v421 = vld [vmem:[%s330 + $0x38] sm:$0xf]
        %v422 = vld [vmem:[%s330 + $0x3c] sm:$0xf]
        %v423 = vld [vmem:[%s339] sm:$0x1]
        %v425 = vperm.slane %v423, 0
        %v429 = vunpack.c.l.b16 %v405
        %v430 = vunpack.c.l.b16 %v406
        %v431 = vpack.c.b16 %v430, %v429
        %v449 = vunpack.c.l.b16 %v407
        %v450 = vunpack.c.l.b16 %v408
        %v451 = vunpack.c.l.b16 %v409
        %v452 = vunpack.c.l.b16 %v410
        %v453 = vunpack.c.l.b16 %v411
        %v454 = vunpack.c.l.b16 %v412
        %v455 = vunpack.c.l.b16 %v413
        %v456 = vunpack.c.l.b16 %v414
        %v457 = vunpack.c.l.b16 %v415
        %v458 = vunpack.c.l.b16 %v416
        %v459 = vunpack.c.l.b16 %v417
        %v460 = vunpack.c.l.b16 %v418
        %v461 = vunpack.c.l.b16 %v419
        %v462 = vunpack.c.l.b16 %v420
        %v463 = vunpack.c.l.b16 %v421
        %v464 = vunpack.c.l.b16 %v422
        %v465 = vpack.c.b16 %v450, %v449
        %v466 = vpack.c.b16 %v452, %v451
        %v467 = vpack.c.b16 %v454, %v453
        %v468 = vpack.c.b16 %v456, %v455
        %v469 = vpack.c.b16 %v458, %v457
        %v470 = vpack.c.b16 %v460, %v459
        %v471 = vpack.c.b16 %v462, %v461
        %v472 = vpack.c.b16 %v464, %v463
        %481 = vmatpush.bf16.msra.mxu0 %v472
        %482 = vmatpush.bf16.msra.mxu0 %v471
        %483 = vmatpush.bf16.msra.mxu0 %v470
        %484 = vmatpush.bf16.msra.mxu0 %v469
        %485 = vmatpush.bf16.msra.mxu0 %v468
        %486 = vmatpush.bf16.msra.mxu0 %v467
        %487 = vmatpush.bf16.msra.mxu0 %v466
        %488 = vmatpush.bf16.msra.mxu0 %v465
        %489 = vmatmul.bf16.gmra.mxu0 %v431
        %v490 = vpop.f32.mrf.mxu0
        %v491 = vadd.f32 %v425, %v490
        %v492 = vpop.f32.mrf.mxu0
        %v493 = vadd.f32 %v425, %v492
        %494 = vdwg.mxu0
        %v495 = vmax.f32 %v491, 0.0
        %v496 = vmax.f32 %v493, 0.0
        %v497 = vpack.c.bf16 %v496, %v495
        %v498 = vld [vmem:[%s349] sm:$0xf]
        %v499 = vld [vmem:[%s349 + $0x4] sm:$0xf]
        %v500 = vld [vmem:[%s349 + $0x8] sm:$0xf]
        %v501 = vld [vmem:[%s349 + $0xc] sm:$0xf]
        %v502 = vld [vmem:[%s349 + $0x10] sm:$0xf]
        %v503 = vld [vmem:[%s349 + $0x14] sm:$0xf]
        %v504 = vld [vmem:[%s349 + $0x18] sm:$0xf]
        %v505 = vld [vmem:[%s349 + $0x1c] sm:$0xf]
        %v506 = vld [vmem:[%s349 + $0x20] sm:$0xf]
        %v507 = vld [vmem:[%s349 + $0x24] sm:$0xf]
        %v508 = vld [vmem:[%s349 + $0x28] sm:$0xf]
        %v509 = vld [vmem:[%s349 + $0x2c] sm:$0xf]
        %v510 = vld [vmem:[%s349 + $0x30] sm:$0xf]
        %v511 = vld [vmem:[%s349 + $0x34] sm:$0xf]
        %v512 = vld [vmem:[%s349 + $0x38] sm:$0xf]
        %v513 = vld [vmem:[%s349 + $0x3c] sm:$0xf]
        %v514 = vld [vmem:[%s402] sm:$0x1]
        %v516 = vperm.slane %v514, 0
        %v534 = vunpack.c.l.b16 %v498
        %v535 = vunpack.c.l.b16 %v499
        %v536 = vunpack.c.l.b16 %v500
        %v537 = vunpack.c.l.b16 %v501
        %v538 = vunpack.c.l.b16 %v502
        %v539 = vunpack.c.l.b16 %v503
        %v540 = vunpack.c.l.b16 %v504
        %v541 = vunpack.c.l.b16 %v505
        %v542 = vunpack.c.l.b16 %v506
        %v543 = vunpack.c.l.b16 %v507
        %v544 = vunpack.c.l.b16 %v508
        %v545 = vunpack.c.l.b16 %v509
        %v546 = vunpack.c.l.b16 %v510
        %v547 = vunpack.c.l.b16 %v511
        %v548 = vunpack.c.l.b16 %v512
        %v549 = vunpack.c.l.b16 %v513
        %v550 = vpack.c.b16 %v535, %v534
        %v551 = vpack.c.b16 %v537, %v536
        %v552 = vpack.c.b16 %v539, %v538
        %v553 = vpack.c.b16 %v541, %v540
        %v554 = vpack.c.b16 %v543, %v542
        %v555 = vpack.c.b16 %v545, %v544
        %v556 = vpack.c.b16 %v547, %v546
        %v557 = vpack.c.b16 %v549, %v548
        %566 = vmatpush.bf16.msra.mxu0 %v557
        %567 = vmatpush.bf16.msra.mxu0 %v556
        %568 = vmatpush.bf16.msra.mxu0 %v555
        %569 = vmatpush.bf16.msra.mxu0 %v554
        %570 = vmatpush.bf16.msra.mxu0 %v553
        %571 = vmatpush.bf16.msra.mxu0 %v552
        %572 = vmatpush.bf16.msra.mxu0 %v551
        %573 = vmatpush.bf16.msra.mxu0 %v550
        %574 = vmatmul.bf16.gmra.mxu0 %v497
        %v575 = vpop.f32.mrf.mxu0
        %v576 = vadd.f32 %v516, %v575
        %v577 = vpop.f32.mrf.mxu0
        %v578 = vadd.f32 %v516, %v577
        %579 = vdwg.mxu0
        %580 = vst [vmem:[%s394] sm:$0xff] %v576
        %581 = vst [vmem:[%s394 + $0x8] sm:$0xff] %v578
        %s582 = sand.u32 %s183, 1
        %s583 = scalar_lea.sflag [#allocation6], %s582
        %s584 = sand.u32 %s183, 1
        %s585 = smul.addr %s584, 16
        %s586 = scalar_lea.vmem [#allocation12], %s585
        // Predicated region
        $region57: #{tpu_custom_call.1} parent=39 // pred_check
          %p587 = pneg %p193
        $region58: #{tpu_custom_call.1} parent=39 // pred_check_branch
          %589 = sbr.rel (%p587) target = $region60
        $region59: #{tpu_custom_call.1} parent=39 // pred_region
          %s590 = smul.u32 2, %s37
          %592 = vsyncadd %s583, 0
          %s593 = smul.addr %s590, 8
          %s594 = scalar_lea.hbm %s6, %s593
          %s595 = sshll.u32 %s586, 4
          %s596 = int_to_ptr.vmem [resolvable:$true] %s595
          %s597 = sshll.u32 %s594, 4
          %s598 = int_to_ptr.hbm [resolvable:$true] %s597
          %603 = dma.vmem_to_hbm [thread:$0]  %s596, 256, %s598, %s583, 128, 128, 8
        $region60: #{tpu_custom_call.1} parent=39 // pred_fallthru
          _
      $region40: #{tpu_custom_call.1} parent=5 // pred_fallthru
        _
      %p604 = scmp.le.s32.totalorder 2, %s32
      // Predicated region
      $region61: #{tpu_custom_call.1} parent=5 // pred_check
        %p605 = pneg %p604
      $region62: #{tpu_custom_call.1} parent=5 // pred_check_branch
        %607 = sbr.rel (%p605) target = $region64
      $region63: #{tpu_custom_call.1} parent=5 // pred_region
        %s608 = ssub.s32 %s32, 2
        // Predicated region
        $region65: #{tpu_custom_call.1} parent=63 // pred_check
          %p609 = pneg %p199
        $region66: #{tpu_custom_call.1} parent=63 // pred_check_branch
          %611 = sbr.rel (%p609) target = $region68
        $region67: #{tpu_custom_call.1} parent=63 // pred_region
          %s612 = sand.u32 %s184, 1
          %s613 = scalar_lea.sflag [#allocation6], %s612
          %s614 = sand.u32 %s184, 1
          %s615 = smul.addr %s614, 16
          %s616 = scalar_lea.vmem [#allocation12], %s615
          %618 = dma.done %s613, 256
        $region68: #{tpu_custom_call.1} parent=63 // pred_fallthru
          _
      $region64: #{tpu_custom_call.1} parent=5 // pred_fallthru
        _
    $region6: #{tpu_custom_call.1} parent=1 // loop_footer
      %s36 = sadd.s32 1, %s32
    $region7: #{tpu_custom_call.1} parent=1 // loop_footer_branch
      %31 = sbr.rel target = $region3
    $region8: #{tpu_custom_call.1} parent=1 // loop_exit
      _
    %619 = vsyncpa [#allocation5], 1
    %s620 = scalar_lea.sflag [#allocation5], 1
    %621 = vsyncpa %s620, 1
    %622 = vsyncpa [#allocation8], 1
    %s623 = scalar_lea.sflag [#allocation8], 1
    %624 = vsyncpa %s623, 1
    %625 = vsyncpa [#allocation11], 1
    %s626 = scalar_lea.sflag [#allocation11], 1
    %627 = vsyncpa %s626, 1
    %628 = vsyncpa [#allocation6], 1
    %s629 = scalar_lea.sflag [#allocation6], 1
    %630 = vsyncpa %s629, 1

</llo_original>
